<compile_context>
chip_gen: v6e
topology: v6e:2x2x1
jax: 0.10.0
libtpu: 0.0.40
codegen_flags: <defaults>
</compile_context>

<pallas_src>
import functools

import jax
import jax.numpy as jnp
from jax.experimental import pallas as pl
from jax.experimental.pallas import tpu as pltpu


def _vq_kernel(x_ref, wnt_ref, w_ref, xq_ref, idx_ref, loss_ref, *,
               m_total, mask_tail):
    # x_ref   : (TM, D) f32 flattened latent rows (streamed per grid step)
    # wnt_ref : (D, K)  f32 = (normalize(codebook) / tau).T   (VMEM resident)
    # w_ref   : (K, D)  f32 raw codebook                      (VMEM resident)
    tm = x_ref.shape[0]
    k = wnt_ref.shape[1]

    x = x_ref[...]
    ss = jnp.sum(x * x, axis=-1, keepdims=True)                    # (TM, 1)
    # matches torch F.normalize: x / max(||x||, 1e-12)
    xn = x * jax.lax.rsqrt(jnp.maximum(ss, 1e-24))

    # logits = (normalize(x) @ normalize(W).T) / tau; 1/tau pre-folded into wnt.
    logits = jnp.dot(xn, wnt_ref[...], preferred_element_type=jnp.float32)  # (TM, K)

    mx = jnp.max(logits, axis=-1, keepdims=True)                   # (TM, 1)
    idx = jnp.argmax(logits, axis=-1)                               # (TM,) int32

    # Codebook gather of the RAW codebook rows via one-hot matmul (MXU).
    onehot = (jax.lax.broadcasted_iota(jnp.int32, (tm, k), 1)
              == idx[:, None]).astype(jnp.float32)
    xq_ref[...] = jnp.dot(onehot, w_ref[...], preferred_element_type=jnp.float32)

    # Per-row cross entropy: logsumexp(logits) - logits[target]; target == argmax,
    # so logits[target] == mx and logsumexp - mx == log(sum(exp(logits - mx))).
    row_loss = jnp.log(jnp.sum(jnp.exp(logits - mx), axis=-1, keepdims=True))  # (TM,1)
    if mask_tail:
        row_id = (pl.program_id(0) * tm
                  + jax.lax.broadcasted_iota(jnp.int32, (tm, 1), 0))
        row_loss = jnp.where(row_id < m_total, row_loss, 0.0)
    # One scalar per tile (summed in the wrapper) instead of an (M, 1) output.
    loss_ref[...] = jnp.sum(row_loss, axis=0, keepdims=True)        # (1, 1)

    # Lane-dense index output: TM on the lane axis (one cheap XLU relayout).
    idx_ref[...] = idx.astype(jnp.int32).reshape(1, tm)


def vector_quantizer_forward(x, codebook, tau=0.2, block_m=512):
    """Eval-mode forward of VectorQuantizer (dist='cos').

    x        : (..., D) float32
    codebook : (K, D)   float32
    Returns (x_q, loss, indices) matching the PyTorch module's forward values
    (indices as int32 instead of int64).
    """
    orig_shape = x.shape
    K, D = codebook.shape
    latent = x.reshape(-1, D).astype(jnp.float32)
    M = latent.shape[0]

    # Hoisted once (outside the grid loop): codebook normalization, 1/tau fold
    # and the (K, D) -> (D, K) transpose.
    w = codebook.astype(jnp.float32)
    wss = jnp.sum(w * w, axis=-1, keepdims=True)
    wn = w * jax.lax.rsqrt(jnp.maximum(wss, 1e-24))
    wnt_scaled = jnp.transpose(wn) / tau                            # (D, K)

    # Row tile: multiple of 128 so the (1, TM) index block stores unmasked.
    TM = min(block_m, ((M + 127) // 128) * 128)
    G = (M + TM - 1) // TM
    M_pad = G * TM
    if M_pad != M:
        latent = jnp.pad(latent, ((0, M_pad - M), (0, 0)))

    kernel = functools.partial(_vq_kernel, m_total=M, mask_tail=(M_pad != M))

    cost = pl.CostEstimate(
        flops=4 * M_pad * K * D + 8 * M_pad * K,
        transcendentals=M_pad * K,
        bytes_accessed=4 * (2 * M_pad * D + 2 * K * D + M_pad + G),
    )

    xq_pad, idx_tiles, loss_tiles = pl.pallas_call(
        kernel,
        out_shape=(
            jax.ShapeDtypeStruct((M_pad, D), jnp.float32),
            jax.ShapeDtypeStruct((G, TM), jnp.int32),
            jax.ShapeDtypeStruct((G, 1), jnp.float32),
        ),
        grid_spec=pltpu.PrefetchScalarGridSpec(
            num_scalar_prefetch=0,
            grid=(G,),
            in_specs=[
                pl.BlockSpec((TM, D), lambda i: (i, 0)),   # latent rows: streamed
                pl.BlockSpec((D, K), lambda i: (0, 0)),    # normalized W^T / tau: resident
                pl.BlockSpec((K, D), lambda i: (0, 0)),    # raw codebook: resident
            ],
            out_specs=(
                pl.BlockSpec((TM, D), lambda i: (i, 0)),   # x_q rows
                pl.BlockSpec((1, TM), lambda i: (i, 0)),   # lane-dense indices
                pl.BlockSpec((1, 1), lambda i: (i, 0)),    # per-tile loss sum
            ),
        ),
        compiler_params=pltpu.CompilerParams(
            dimension_semantics=("parallel",),
            vmem_limit_bytes=64 * 1024 * 1024,
        ),
        cost_estimate=cost,
    )(latent, wnt_scaled, w)

    loss = jnp.sum(loss_tiles) / M                 # F.cross_entropy mean reduction
    x_q = xq_pad[:M].reshape(orig_shape)           # value of x + (x_q - x).detach()
    indices = idx_tiles.reshape(-1)[:M].reshape(orig_shape[:-1])
    return x_q, loss, indices


def _l2_normalize_ref(v, eps=1e-12):
    norm = jnp.sqrt(jnp.sum(v * v, axis=-1, keepdims=True))
    return v / jnp.maximum(norm, eps)


def _reference_forward(x, codebook, tau=0.2):
    # Pure-JAX reference mirroring the torch module (eval mode, dist='cos').
    D = codebook.shape[1]
    latent = x.reshape(-1, D)
    cos = _l2_normalize_ref(latent) @ _l2_normalize_ref(codebook).T
    logits = cos / tau
    idx = jnp.argmax(logits, axis=-1)
    x_q = codebook[idx].reshape(x.shape)
    lse = jax.scipy.special.logsumexp(logits, axis=-1)
    loss = jnp.mean(lse - jnp.take_along_axis(logits, idx[:, None], axis=-1)[:, 0])
    return x_q, loss, idx.reshape(x.shape[:-1]).astype(jnp.int32)


if __name__ == "__main__":
    codebook_size = 64     # K
    codebook_dim = 32      # D
    tau = 0.2

    key = jax.random.PRNGKey(0)
    kx, kw = jax.random.split(key)
    # x: (batch=2, seq=8, codebook_dim=32); feature dim last.
    x = jax.random.normal(kx, (2, 8, codebook_dim), dtype=jnp.float32)
    # The PyTorch module zero-inits the codebook and fills it via kmeans at
    # train time; here we use a deterministic random codebook instead.
    codebook = jax.random.normal(kw, (codebook_size, codebook_dim),
                                 dtype=jnp.float32) * 0.1

    x_q, loss, indices = vector_quantizer_forward(x, codebook, tau=tau)
    jax.block_until_ready((x_q, loss, indices))

    # Sanity-check against the pure-JAX reference.
    xr, lr, ir = _reference_forward(x, codebook, tau=tau)
    assert jnp.allclose(x_q, xr, atol=1e-5), "x_q mismatch"
    assert jnp.allclose(loss, lr, atol=1e-5), "loss mismatch"
    assert jnp.array_equal(indices, ir), "indices mismatch"

    print("KERNEL_OK")
</pallas_src>

<mosaic_0001>
module attributes {stable_mosaic.version = 11 : i64} {
  func.func @_vq_kernel(%arg0: i32, %arg1: memref<128x32xf32, #tpu.memory_space<vmem>>, %arg2: memref<32x64xf32, #tpu.memory_space<vmem>>, %arg3: memref<64x32xf32, #tpu.memory_space<vmem>>, %arg4: memref<128x32xf32, #tpu.memory_space<vmem>>, %arg5: memref<1x128xi32, #tpu.memory_space<vmem>>, %arg6: memref<1x1xf32, #tpu.memory_space<vmem>>) attributes {dimension_semantics = [#tpu.dimension_semantics<parallel>], iteration_bounds = array<i64: 1>, scalar_prefetch = 0 : i64, scratch_operands = 0 : i64, tpu.core_type = #tpu.core_type<tc>, window_params = [{transform_indices = @transform_0, window_bounds = array<i64: 128, 32>}, {pipeline_mode = #tpu.pipeline_mode<synchronous>, transform_indices = @transform_1, window_bounds = array<i64: 32, 64>}, {pipeline_mode = #tpu.pipeline_mode<synchronous>, transform_indices = @transform_2, window_bounds = array<i64: 64, 32>}, {transform_indices = @transform_3, window_bounds = array<i64: 128, 32>}, {transform_indices = @transform_4, window_bounds = array<i64: 1, 128>}, {transform_indices = @transform_5, window_bounds = array<i64: 1, 1>}]} {
    %c0 = arith.constant 0 : index
    %c0_0 = arith.constant 0 : index
    %0 = vector.load %arg1[%c0, %c0_0] : memref<128x32xf32, #tpu.memory_space<vmem>>, vector<128x32xf32>
    %1 = arith.mulf %0, %0 : vector<128x32xf32>
    %cst = arith.constant dense<0.000000e+00> : vector<128xf32>
    %2 = vector.multi_reduction <add>, %1, %cst [1] : vector<128x32xf32> to vector<128xf32>
    %3 = vector.shape_cast %2 : vector<128xf32> to vector<128x1xf32>
    %cst_1 = arith.constant 1.000000e-24 : f32
    %4 = vector.broadcast %cst_1 : f32 to vector<128x1xf32>
    %5 = arith.maximumf %3, %4 : vector<128x1xf32>
    %6 = math.rsqrt %5 : vector<128x1xf32>
    %7 = vector.broadcast %6 : vector<128x1xf32> to vector<128x32xf32>
    %8 = arith.mulf %0, %7 : vector<128x32xf32>
    %c0_2 = arith.constant 0 : index
    %c0_3 = arith.constant 0 : index
    %9 = vector.load %arg2[%c0_2, %c0_3] : memref<32x64xf32, #tpu.memory_space<vmem>>, vector<32x64xf32>
    %cst_4 = arith.constant dense<0.000000e+00> : vector<128x64xf32>
    %10 = tpu.matmul %8, %9, %cst_4 {dimension_numbers = #tpu.dot_dimension_numbers<[1], [0], [0], [1], [0, 0, 1, 1], [], []>} : vector<128x32xf32>, vector<32x64xf32>, vector<128x64xf32> -> vector<128x64xf32>
    %cst_5 = arith.constant dense<0xFF800000> : vector<128xf32>
    %11 = vector.multi_reduction <maximumf>, %10, %cst_5 [1] : vector<128x64xf32> to vector<128xf32>
    %12 = vector.shape_cast %11 : vector<128xf32> to vector<128x1xf32>
    %13 = tpu.reduce_index %10 {axis = 1 : i32, kind = #tpu.reduction_kind<arg_max>} : vector<128x64xf32> -> vector<128xi32>
    %14 = tpu.iota {dimensions = array<i32: 1>} : vector<128x64xi32>
    %15 = vector.shape_cast %13 : vector<128xi32> to vector<128x1xi32>
    %16 = vector.broadcast %15 : vector<128x1xi32> to vector<128x64xi32>
    %17 = arith.cmpi eq, %14, %16 : vector<128x64xi32>
    %18 = arith.extui %17 : vector<128x64xi1> to vector<128x64xi32>
    %19 = arith.sitofp %18 : vector<128x64xi32> to vector<128x64xf32>
    %c0_6 = arith.constant 0 : index
    %c0_7 = arith.constant 0 : index
    %20 = vector.load %arg3[%c0_6, %c0_7] : memref<64x32xf32, #tpu.memory_space<vmem>>, vector<64x32xf32>
    %cst_8 = arith.constant dense<0.000000e+00> : vector<128x32xf32>
    %21 = tpu.matmul %19, %20, %cst_8 {dimension_numbers = #tpu.dot_dimension_numbers<[1], [0], [0], [1], [0, 0, 1, 1], [], []>} : vector<128x64xf32>, vector<64x32xf32>, vector<128x32xf32> -> vector<128x32xf32>
    %c0_9 = arith.constant 0 : index
    %c0_10 = arith.constant 0 : index
    %22 = vector.load %arg4[%c0_9, %c0_10] : memref<128x32xf32, #tpu.memory_space<vmem>>, vector<128x32xf32>
    tpu.vector_store %arg4[%c0_9, %c0_10], %21 {strides = array<i32>} : memref<128x32xf32, #tpu.memory_space<vmem>>, vector<128x32xf32>,
    %23 = vector.broadcast %12 : vector<128x1xf32> to vector<128x64xf32>
    %24 = arith.subf %10, %23 : vector<128x64xf32>
    %25 = math.exp %24 : vector<128x64xf32>
    %cst_11 = arith.constant dense<0.000000e+00> : vector<128xf32>
    %26 = vector.multi_reduction <add>, %25, %cst_11 [1] : vector<128x64xf32> to vector<128xf32>
    %27 = vector.shape_cast %26 : vector<128xf32> to vector<128x1xf32>
    %28 = math.log %27 : vector<128x1xf32>
    %c128_i32 = arith.constant 128 : i32
    %29 = arith.muli %arg0, %c128_i32 : i32
    %30 = tpu.iota {dimensions = array<i32: 0>} : vector<128x1xi32>
    %31 = vector.broadcast %29 : i32 to vector<128x1xi32>
    %32 = arith.addi %31, %30 : vector<128x1xi32>
    %c16_i32 = arith.constant 16 : i32
    %33 = vector.broadcast %c16_i32 : i32 to vector<128x1xi32>
    %34 = arith.cmpi slt, %32, %33 : vector<128x1xi32>
    %cst_12 = arith.constant 0.000000e+00 : f32
    %35 = vector.broadcast %cst_12 : f32 to vector<128x1xf32>
    %36 = arith.select %34, %28, %35 : vector<128x1xi1>, vector<128x1xf32>
    %cst_13 = arith.constant dense<0.000000e+00> : vector<1xf32>
    %37 = vector.multi_reduction <add>, %36, %cst_13 [0] : vector<128x1xf32> to vector<1xf32>
    %38 = vector.shape_cast %37 : vector<1xf32> to vector<1x1xf32>
    %c0_14 = arith.constant 0 : index
    %c0_15 = arith.constant 0 : index
    %39 = vector.load %arg6[%c0_14, %c0_15] : memref<1x1xf32, #tpu.memory_space<vmem>>, vector<1x1xf32>
    tpu.vector_store %arg6[%c0_14, %c0_15], %38 {strides = array<i32>} : memref<1x1xf32, #tpu.memory_space<vmem>>, vector<1x1xf32>,
    %40 = vector.shape_cast %13 : vector<128xi32> to vector<1x128xi32>
    %c0_16 = arith.constant 0 : index
    %c0_17 = arith.constant 0 : index
    %41 = vector.load %arg5[%c0_16, %c0_17] : memref<1x128xi32, #tpu.memory_space<vmem>>, vector<1x128xi32>
    tpu.vector_store %arg5[%c0_16, %c0_17], %40 {strides = array<i32>} : memref<1x128xi32, #tpu.memory_space<vmem>>, vector<1x128xi32>,
    return
  }
  func.func @transform_0(%arg0: i32) -> (i32, i32) {
    %c0_i32 = arith.constant 0 : i32
    %c0_i32_0 = arith.constant 0 : i32
    return %arg0, %c0_i32 : i32, i32
  }
  func.func @transform_1(%arg0: i32) -> (i32, i32) {
    %c0_i32 = arith.constant 0 : i32
    %c0_i32_0 = arith.constant 0 : i32
    %c0_i32_1 = arith.constant 0 : i32
    return %c0_i32, %c0_i32_0 : i32, i32
  }
  func.func @transform_2(%arg0: i32) -> (i32, i32) {
    %c0_i32 = arith.constant 0 : i32
    %c0_i32_0 = arith.constant 0 : i32
    %c0_i32_1 = arith.constant 0 : i32
    return %c0_i32, %c0_i32_0 : i32, i32
  }
  func.func @transform_3(%arg0: i32) -> (i32, i32) {
    %c0_i32 = arith.constant 0 : i32
    %c0_i32_0 = arith.constant 0 : i32
    return %arg0, %c0_i32 : i32, i32
  }
  func.func @transform_4(%arg0: i32) -> (i32, i32) {
    %c0_i32 = arith.constant 0 : i32
    %c0_i32_0 = arith.constant 0 : i32
    return %arg0, %c0_i32 : i32, i32
  }
  func.func @transform_5(%arg0: i32) -> (i32, i32) {
    %c0_i32 = arith.constant 0 : i32
    %c0_i32_0 = arith.constant 0 : i32
    return %arg0, %c0_i32 : i32, i32
  }
}

</mosaic_0001>

<llo_original>
// kernel: tpu_custom_call.1
$region0: #{tpu_custom_call.1}
  #allocation0 [shape = 'u32[]', space=smem, size = 0x4, offset = 0x4, fixed_abs, tag = 'smem constant byte address 0x4 - core index']
  #allocation1 [shape = 'u32[144,128]{1,0:T(1,128)}', space=vmem, size = 0x12000, scoped, tag = 'internal scratch']
  %s0 = inlined_call_operand.vmem [shape: f32[128,32], index: 0, kind: input, shape index: {}]
  %s1 = inlined_call_operand.vmem [shape: f32[32,64], index: 1, kind: input, shape index: {}]
  %s2 = inlined_call_operand.vmem [shape: f32[64,32], index: 2, kind: input, shape index: {}]
  %s3 = inlined_call_operand.vmem [shape: f32[128,32], index: 3, kind: output, shape index: {0}]
  %s4 = inlined_call_operand.hbm [shape: s32[1,128], index: 4, kind: output, shape index: {1}]
  %s5 = inlined_call_operand.hbm [shape: f32[1,1], index: 5, kind: output, shape index: {2}]
  %6 = xla_tuple %s3, %s4, %s5
  %s7 = sld [smem:[#allocation0]]
  $region38: #{tpu_custom_call.1} parent=0
    _
  %s9 = ssub.s32 1, %s7
  %s10 = scalar_select 0, %s9, %s7
  $region1: #{tpu_custom_call.1} parent=0
    #allocation2 [shape = 'u8[512]{0}', space=vmem, size = 0x400, scoped, tag = 'output window, operand 1, single buffered']
    #allocation3 [shape = 's32[1]{0}', space=sflag, size = 0x4, scoped, tag = 'scoped memory for tpu_custom_call.1']
    #allocation4 [shape = 'u8[512]{0}', space=vmem, size = 0x400, scoped, tag = 'output window, operand 2, single buffered']
    #allocation5 [shape = 's32[1]{0}', space=sflag, size = 0x4, scoped, tag = 'scoped memory for tpu_custom_call.1']
    %11 = vsyncpa [#allocation3], 0
    %12 = vsyncpa [#allocation5], 0
    // Predicated region
    $region2: #{tpu_custom_call.1} parent=1 // pred_check
      _
    $region3: #{tpu_custom_call.1} parent=1 // pred_check_branch
      %14 = sbr.rel (0) target = $region5
    $region4: #{tpu_custom_call.1} parent=1 // pred_region
      _
    $region5: #{tpu_custom_call.1} parent=1 // pred_fallthru
      _
    // Predicated region
    $region6: #{tpu_custom_call.1} parent=1 // pred_check
      _
    $region7: #{tpu_custom_call.1} parent=1 // pred_check_branch
      %16 = sbr.rel (0) target = $region9
    $region8: #{tpu_custom_call.1} parent=1 // pred_region
      _
    $region9: #{tpu_custom_call.1} parent=1 // pred_fallthru
      _
    // Predicated region
    $region10: #{tpu_custom_call.1} parent=1 // pred_check
      _
    $region11: #{tpu_custom_call.1} parent=1 // pred_check_branch
      %18 = sbr.rel (0) target = $region13
    $region12: #{tpu_custom_call.1} parent=1 // pred_region
      _
    $region13: #{tpu_custom_call.1} parent=1 // pred_fallthru
      _
    %v19 = vld [vmem:[%s0] sm:$0xff]
    %v20 = vld [vmem:[%s0 + $0x8] sm:$0xff]
    %v21 = vld [vmem:[%s0 + $0x10] sm:$0xff]
    %v22 = vld [vmem:[%s0 + $0x18] sm:$0xff]
    %v23 = vld [vmem:[%s0 + $0x20] sm:$0xff]
    %v24 = vld [vmem:[%s0 + $0x28] sm:$0xff]
    %v25 = vld [vmem:[%s0 + $0x30] sm:$0xff]
    %v26 = vld [vmem:[%s0 + $0x38] sm:$0xff]
    %v27 = vld [vmem:[%s0 + $0x40] sm:$0xff]
    %v28 = vld [vmem:[%s0 + $0x48] sm:$0xff]
    %v29 = vld [vmem:[%s0 + $0x50] sm:$0xff]
    %v30 = vld [vmem:[%s0 + $0x58] sm:$0xff]
    %v31 = vld [vmem:[%s0 + $0x60] sm:$0xff]
    %v32 = vld [vmem:[%s0 + $0x68] sm:$0xff]
    %v33 = vld [vmem:[%s0 + $0x70] sm:$0xff]
    %v34 = vld [vmem:[%s0 + $0x78] sm:$0xff]
    %v35 = vmul.f32 %v19, %v19
    %v36 = vmul.f32 %v20, %v20
    %v37 = vmul.f32 %v21, %v21
    %v38 = vmul.f32 %v22, %v22
    %v39 = vmul.f32 %v23, %v23
    %v40 = vmul.f32 %v24, %v24
    %v41 = vmul.f32 %v25, %v25
    %v42 = vmul.f32 %v26, %v26
    %v43 = vmul.f32 %v27, %v27
    %v44 = vmul.f32 %v28, %v28
    %v45 = vmul.f32 %v29, %v29
    %v46 = vmul.f32 %v30, %v30
    %v47 = vmul.f32 %v31, %v31
    %v48 = vmul.f32 %v32, %v32
    %v49 = vmul.f32 %v33, %v33
    %v50 = vmul.f32 %v34, %v34
    %vm51 = vcmask 261120
    %v52 = vsel %vm51, %v35, 0.0
    %53 = vadd.xlane.f32.xlu0 %v52
    %v54 = vpop.xlane.xlu0 %53
    %v55 = vsel %vm51, %v36, 0.0
    %56 = vadd.xlane.f32.xlu0 %v55
    %v57 = vpop.xlane.xlu0 %56
    %v58 = vsel %vm51, %v37, 0.0
    %59 = vadd.xlane.f32.xlu0 %v58
    %v60 = vpop.xlane.xlu0 %59
    %v61 = vsel %vm51, %v38, 0.0
    %62 = vadd.xlane.f32.xlu0 %v61
    %v63 = vpop.xlane.xlu0 %62
    %v64 = vsel %vm51, %v39, 0.0
    %65 = vadd.xlane.f32.xlu0 %v64
    %v66 = vpop.xlane.xlu0 %65
    %v67 = vsel %vm51, %v40, 0.0
    %68 = vadd.xlane.f32.xlu0 %v67
    %v69 = vpop.xlane.xlu0 %68
    %v70 = vsel %vm51, %v41, 0.0
    %71 = vadd.xlane.f32.xlu0 %v70
    %v72 = vpop.xlane.xlu0 %71
    %v73 = vsel %vm51, %v42, 0.0
    %74 = vadd.xlane.f32.xlu0 %v73
    %v75 = vpop.xlane.xlu0 %74
    %v76 = vsel %vm51, %v43, 0.0
    %77 = vadd.xlane.f32.xlu0 %v76
    %v78 = vpop.xlane.xlu0 %77
    %v79 = vsel %vm51, %v44, 0.0
    %80 = vadd.xlane.f32.xlu0 %v79
    %v81 = vpop.xlane.xlu0 %80
    %v82 = vsel %vm51, %v45, 0.0
    %83 = vadd.xlane.f32.xlu0 %v82
    %v84 = vpop.xlane.xlu0 %83
    %v85 = vsel %vm51, %v46, 0.0
    %86 = vadd.xlane.f32.xlu0 %v85
    %v87 = vpop.xlane.xlu0 %86
    %v88 = vsel %vm51, %v47, 0.0
    %89 = vadd.xlane.f32.xlu0 %v88
    %v90 = vpop.xlane.xlu0 %89
    %v91 = vsel %vm51, %v48, 0.0
    %92 = vadd.xlane.f32.xlu0 %v91
    %v93 = vpop.xlane.xlu0 %92
    %v94 = vsel %vm51, %v49, 0.0
    %95 = vadd.xlane.f32.xlu0 %v94
    %v96 = vpop.xlane.xlu0 %95
    %v97 = vsel %vm51, %v50, 0.0
    %98 = vadd.xlane.f32.xlu0 %v97
    %v99 = vpop.xlane.xlu0 %98
    %v100 = vmax.f32 %v54, 1e-24
    %v101 = vmax.f32 %v57, 1e-24
    %v102 = vmax.f32 %v60, 1e-24
    %v103 = vmax.f32 %v63, 1e-24
    %v104 = vmax.f32 %v66, 1e-24
    %v105 = vmax.f32 %v69, 1e-24
    %v106 = vmax.f32 %v72, 1e-24
    %v107 = vmax.f32 %v75, 1e-24
    %v108 = vmax.f32 %v78, 1e-24
    %v109 = vmax.f32 %v81, 1e-24
    %v110 = vmax.f32 %v84, 1e-24
    %v111 = vmax.f32 %v87, 1e-24
    %v112 = vmax.f32 %v90, 1e-24
    %v113 = vmax.f32 %v93, 1e-24
    %v114 = vmax.f32 %v96, 1e-24
    %v115 = vmax.f32 %v99, 1e-24
    %v116 = vrsqrt.pop %v100
    %v117 = vrsqrt.pop %v101
    %v118 = vrsqrt.pop %v102
    %v119 = vrsqrt.pop %v103
    %v120 = vrsqrt.pop %v104
    %v121 = vrsqrt.pop %v105
    %v122 = vrsqrt.pop %v106
    %v123 = vrsqrt.pop %v107
    %v124 = vrsqrt.pop %v108
    %v125 = vrsqrt.pop %v109
    %v126 = vrsqrt.pop %v110
    %v127 = vrsqrt.pop %v111
    %v128 = vrsqrt.pop %v112
    %v129 = vrsqrt.pop %v113
    %v130 = vrsqrt.pop %v114
    %v131 = vrsqrt.pop %v115
    %v132 = vmul.f32 %v19, %v116
    %v133 = vmul.f32 %v20, %v117
    %v134 = vmul.f32 %v21, %v118
    %v135 = vmul.f32 %v22, %v119
    %v136 = vmul.f32 %v23, %v120
    %v137 = vmul.f32 %v24, %v121
    %v138 = vmul.f32 %v25, %v122
    %v139 = vmul.f32 %v26, %v123
    %v140 = vmul.f32 %v27, %v124
    %v141 = vmul.f32 %v28, %v125
    %v142 = vmul.f32 %v29, %v126
    %v143 = vmul.f32 %v30, %v127
    %v144 = vmul.f32 %v31, %v128
    %v145 = vmul.f32 %v32, %v129
    %v146 = vmul.f32 %v33, %v130
    %v147 = vmul.f32 %v34, %v131
    %v148 = vld [vmem:[%s1] sm:$0xff]
    %v149 = vld [vmem:[%s1 + $0x8] sm:$0xff]
    %v150 = vld [vmem:[%s1 + $0x10] sm:$0xff]
    %v151 = vld [vmem:[%s1 + $0x18] sm:$0xff]
    %v153 = vsel %vm51, %v132, 0
    %v156 = vsel %vm51, %v133, 0
    %v159 = vsel %vm51, %v134, 0
    %v162 = vsel %vm51, %v135, 0
    %v165 = vsel %vm51, %v136, 0
    %v168 = vsel %vm51, %v137, 0
    %v171 = vsel %vm51, %v138, 0
    %v174 = vsel %vm51, %v139, 0
    %v177 = vsel %vm51, %v140, 0
    %v180 = vsel %vm51, %v141, 0
    %v183 = vsel %vm51, %v142, 0
    %v186 = vsel %vm51, %v143, 0
    %v189 = vsel %vm51, %v144, 0
    %v192 = vsel %vm51, %v145, 0
    %v195 = vsel %vm51, %v146, 0
    %v198 = vsel %vm51, %v147, 0
    %200 = vmatprep.subr.mxu0 0.0
    %201 = vmatpush1.msra.mxu0 0.0
    %202 = vmatprep.subr.mxu0 0.0
    %203 = vmatpush1.msra.mxu0 0.0
    %204 = vmatprep.subr.mxu0 0.0
    %205 = vmatpush1.msra.mxu0 0.0
    %206 = vmatprep.subr.mxu0 0.0
    %207 = vmatpush1.msra.mxu0 0.0
    %208 = vmatprep.subr.mxu0 0.0
    %209 = vmatpush1.msra.mxu0 0.0
    %210 = vmatprep.subr.mxu0 0.0
    %211 = vmatpush1.msra.mxu0 0.0
    %212 = vmatprep.subr.mxu0 0.0
    %213 = vmatpush1.msra.mxu0 0.0
    %214 = vmatprep.subr.mxu0 0.0
    %215 = vmatpush1.msra.mxu0 0.0
    %216 = vmatprep.subr.mxu0 0.0
    %217 = vmatpush1.msra.mxu0 0.0
    %218 = vmatprep.subr.mxu0 0.0
    %219 = vmatpush1.msra.mxu0 0.0
    %220 = vmatprep.subr.mxu0 0.0
    %221 = vmatpush1.msra.mxu0 0.0
    %222 = vmatprep.subr.mxu0 0.0
    %223 = vmatpush1.msra.mxu0 0.0
    %224 = vmatprep.subr.mxu0 0.0
    %225 = vmatpush1.msra.mxu0 %v151
    %226 = vmatprep.subr.mxu0 0.0
    %227 = vmatpush1.msra.mxu0 %v150
    %228 = vmatprep.subr.mxu0 0.0
    %229 = vmatpush1.msra.mxu0 %v149
    %230 = vmatprep.subr.mxu0 0.0
    %231 = vmatpush1.msra.mxu0 %v148
    %232 = vmatprep.subr.mxu0 0.0
    %233 = vmatpush2.msra.mxu0 0.0
    %234 = vmatprep.subr.mxu0 0.0
    %235 = vmatpush2.msra.mxu0 0.0
    %236 = vmatprep.subr.mxu0 0.0
    %237 = vmatpush2.msra.mxu0 0.0
    %238 = vmatprep.subr.mxu0 0.0
    %239 = vmatpush2.msra.mxu0 0.0
    %240 = vmatprep.subr.mxu0 0.0
    %241 = vmatpush2.msra.mxu0 0.0
    %242 = vmatprep.subr.mxu0 0.0
    %243 = vmatpush2.msra.mxu0 0.0
    %244 = vmatprep.subr.mxu0 0.0
    %245 = vmatpush2.msra.mxu0 0.0
    %246 = vmatprep.subr.mxu0 0.0
    %247 = vmatpush2.msra.mxu0 0.0
    %248 = vmatprep.subr.mxu0 0.0
    %249 = vmatpush2.msra.mxu0 0.0
    %250 = vmatprep.subr.mxu0 0.0
    %251 = vmatpush2.msra.mxu0 0.0
    %252 = vmatprep.subr.mxu0 0.0
    %253 = vmatpush2.msra.mxu0 0.0
    %254 = vmatprep.subr.mxu0 0.0
    %255 = vmatpush2.msra.mxu0 0.0
    %256 = vmatprep.subr.mxu0 0.0
    %257 = vmatpush2.msra.mxu0 0.0
    %258 = vmatprep.subr.mxu0 0.0
    %259 = vmatpush2.msra.mxu0 0.0
    %260 = vmatprep.subr.mxu0 0.0
    %261 = vmatpush2.msra.mxu0 0.0
    %262 = vmatprep.subr.mxu0 0.0
    %263 = vmatpush2.msra.mxu0 0.0
    %264 = vmatprep.mubr.f32.mxu0 0.0
    %265 = vmatmul.mubr.f32.gmra.mxu0 %v153
    %v266 = vpop.f32.mrf.mxu0
    %v267 = vadd.f32 0.0, %v266
    %v268 = vpop.f32.mrf.mxu0
    %269 = vmatprep.mubr.f32.mxu0 0.0
    %270 = vmatmul.mubr.f32.gmra.mxu0 %v156
    %v271 = vpop.f32.mrf.mxu0
    %v272 = vadd.f32 0.0, %v271
    %v273 = vpop.f32.mrf.mxu0
    %274 = vmatprep.mubr.f32.mxu0 0.0
    %275 = vmatmul.mubr.f32.gmra.mxu0 %v159
    %v276 = vpop.f32.mrf.mxu0
    %v277 = vadd.f32 0.0, %v276
    %v278 = vpop.f32.mrf.mxu0
    %279 = vmatprep.mubr.f32.mxu0 0.0
    %280 = vmatmul.mubr.f32.gmra.mxu0 %v162
    %v281 = vpop.f32.mrf.mxu0
    %v282 = vadd.f32 0.0, %v281
    %v283 = vpop.f32.mrf.mxu0
    %284 = vmatprep.mubr.f32.mxu0 0.0
    %285 = vmatmul.mubr.f32.gmra.mxu0 %v165
    %v286 = vpop.f32.mrf.mxu0
    %v287 = vadd.f32 0.0, %v286
    %v288 = vpop.f32.mrf.mxu0
    %289 = vmatprep.mubr.f32.mxu0 0.0
    %290 = vmatmul.mubr.f32.gmra.mxu0 %v168
    %v291 = vpop.f32.mrf.mxu0
    %v292 = vadd.f32 0.0, %v291
    %v293 = vpop.f32.mrf.mxu0
    %294 = vmatprep.mubr.f32.mxu0 0.0
    %295 = vmatmul.mubr.f32.gmra.mxu0 %v171
    %v296 = vpop.f32.mrf.mxu0
    %v297 = vadd.f32 0.0, %v296
    %v298 = vpop.f32.mrf.mxu0
    %299 = vmatprep.mubr.f32.mxu0 0.0
    %300 = vmatmul.mubr.f32.gmra.mxu0 %v174
    %v301 = vpop.f32.mrf.mxu0
    %v302 = vadd.f32 0.0, %v301
    %v303 = vpop.f32.mrf.mxu0
    %304 = vmatprep.mubr.f32.mxu0 0.0
    %305 = vmatmul.mubr.f32.gmra.mxu0 %v177
    %v306 = vpop.f32.mrf.mxu0
    %v307 = vadd.f32 0.0, %v306
    %v308 = vpop.f32.mrf.mxu0
    %309 = vmatprep.mubr.f32.mxu0 0.0
    %310 = vmatmul.mubr.f32.gmra.mxu0 %v180
    %v311 = vpop.f32.mrf.mxu0
    %v312 = vadd.f32 0.0, %v311
    %v313 = vpop.f32.mrf.mxu0
    %314 = vmatprep.mubr.f32.mxu0 0.0
    %315 = vmatmul.mubr.f32.gmra.mxu0 %v183
    %v316 = vpop.f32.mrf.mxu0
    %v317 = vadd.f32 0.0, %v316
    %v318 = vpop.f32.mrf.mxu0
    %319 = vmatprep.mubr.f32.mxu0 0.0
    %320 = vmatmul.mubr.f32.gmra.mxu0 %v186
    %v321 = vpop.f32.mrf.mxu0
    %v322 = vadd.f32 0.0, %v321
    %v323 = vpop.f32.mrf.mxu0
    %324 = vmatprep.mubr.f32.mxu0 0.0
    %325 = vmatmul.mubr.f32.gmra.mxu0 %v189
    %v326 = vpop.f32.mrf.mxu0
    %v327 = vadd.f32 0.0, %v326
    %v328 = vpop.f32.mrf.mxu0
    %329 = vmatprep.mubr.f32.mxu0 0.0
    %330 = vmatmul.mubr.f32.gmra.mxu0 %v192
    %v331 = vpop.f32.mrf.mxu0
    %v332 = vadd.f32 0.0, %v331
    %v333 = vpop.f32.mrf.mxu0
    %334 = vmatprep.mubr.f32.mxu0 0.0
    %335 = vmatmul.mubr.f32.gmra.mxu0 %v195
    %v336 = vpop.f32.mrf.mxu0
    %v337 = vadd.f32 0.0, %v336
    %v338 = vpop.f32.mrf.mxu0
    %339 = vmatprep.mubr.f32.mxu0 0.0
    %340 = vmatmul.mubr.f32.gmra.mxu0 %v198
    %v341 = vpop.f32.mrf.mxu0
    %v342 = vadd.f32 0.0, %v341
    %v343 = vpop.f32.mrf.mxu0
    %344 = vdwg.mxu0
    %vm345 = vcmask 523264
    %v346 = vsel %vm345, %v267, -inf
    %347 = vmax.xlane.f32.xlu0 %v346
    %v348 = vpop.xlane.xlu0 %347
    %v349 = vsel %vm345, %v272, -inf
    %350 = vmax.xlane.f32.xlu0 %v349
    %v351 = vpop.xlane.xlu0 %350
    %v352 = vsel %vm345, %v277, -inf
    %353 = vmax.xlane.f32.xlu0 %v352
    %v354 = vpop.xlane.xlu0 %353
    %v355 = vsel %vm345, %v282, -inf
    %356 = vmax.xlane.f32.xlu0 %v355
    %v357 = vpop.xlane.xlu0 %356
    %v358 = vsel %vm345, %v287, -inf
    %359 = vmax.xlane.f32.xlu0 %v358
    %v360 = vpop.xlane.xlu0 %359
    %v361 = vsel %vm345, %v292, -inf
    %362 = vmax.xlane.f32.xlu0 %v361
    %v363 = vpop.xlane.xlu0 %362
    %v364 = vsel %vm345, %v297, -inf
    %365 = vmax.xlane.f32.xlu0 %v364
    %v366 = vpop.xlane.xlu0 %365
    %v367 = vsel %vm345, %v302, -inf
    %368 = vmax.xlane.f32.xlu0 %v367
    %v369 = vpop.xlane.xlu0 %368
    %v370 = vsel %vm345, %v307, -inf
    %371 = vmax.xlane.f32.xlu0 %v370
    %v372 = vpop.xlane.xlu0 %371
    %v373 = vsel %vm345, %v312, -inf
    %374 = vmax.xlane.f32.xlu0 %v373
    %v375 = vpop.xlane.xlu0 %374
    %v376 = vsel %vm345, %v317, -inf
    %377 = vmax.xlane.f32.xlu0 %v376
    %v378 = vpop.xlane.xlu0 %377
    %v379 = vsel %vm345, %v322, -inf
    %380 = vmax.xlane.f32.xlu0 %v379
    %v381 = vpop.xlane.xlu0 %380
    %v382 = vsel %vm345, %v327, -inf
    %383 = vmax.xlane.f32.xlu0 %v382
    %v384 = vpop.xlane.xlu0 %383
    %v385 = vsel %vm345, %v332, -inf
    %386 = vmax.xlane.f32.xlu0 %v385
    %v387 = vpop.xlane.xlu0 %386
    %v388 = vsel %vm345, %v337, -inf
    %389 = vmax.xlane.f32.xlu0 %v388
    %v390 = vpop.xlane.xlu0 %389
    %v391 = vsel %vm345, %v342, -inf
    %392 = vmax.xlane.f32.xlu0 %v391
    %v393 = vpop.xlane.xlu0 %392
    %394 = vmax.index.xlane.f32.xlu0 %v346
    %v395 = vpop.xlane.xlu0 %394
    %396 = vmax.index.xlane.f32.xlu0 %v349
    %v397 = vpop.xlane.xlu0 %396
    %398 = vmax.index.xlane.f32.xlu0 %v352
    %v399 = vpop.xlane.xlu0 %398
    %400 = vmax.index.xlane.f32.xlu0 %v355
    %v401 = vpop.xlane.xlu0 %400
    %402 = vmax.index.xlane.f32.xlu0 %v358
    %v403 = vpop.xlane.xlu0 %402
    %404 = vmax.index.xlane.f32.xlu0 %v361
    %v405 = vpop.xlane.xlu0 %404
    %406 = vmax.index.xlane.f32.xlu0 %v364
    %v407 = vpop.xlane.xlu0 %406
    %408 = vmax.index.xlane.f32.xlu0 %v367
    %v409 = vpop.xlane.xlu0 %408
    %410 = vmax.index.xlane.f32.xlu0 %v370
    %v411 = vpop.xlane.xlu0 %410
    %412 = vmax.index.xlane.f32.xlu0 %v373
    %v413 = vpop.xlane.xlu0 %412
    %414 = vmax.index.xlane.f32.xlu0 %v376
    %v415 = vpop.xlane.xlu0 %414
    %416 = vmax.index.xlane.f32.xlu0 %v379
    %v417 = vpop.xlane.xlu0 %416
    %418 = vmax.index.xlane.f32.xlu0 %v382
    %v419 = vpop.xlane.xlu0 %418
    %420 = vmax.index.xlane.f32.xlu0 %v385
    %v421 = vpop.xlane.xlu0 %420
    %422 = vmax.index.xlane.f32.xlu0 %v388
    %v423 = vpop.xlane.xlu0 %422
    %424 = vmax.index.xlane.f32.xlu0 %v391
    %v425 = vpop.xlane.xlu0 %424
    %v426 = vlaneseq
    %v427 = vand.u32 %v426, 127
    %vm428 = vcmp.eq.s32.totalorder %v427, %v395
    %vm429 = vcmp.eq.s32.totalorder %v427, %v397
    %vm430 = vcmp.eq.s32.totalorder %v427, %v399
    %vm431 = vcmp.eq.s32.totalorder %v427, %v401
    %vm432 = vcmp.eq.s32.totalorder %v427, %v403
    %vm433 = vcmp.eq.s32.totalorder %v427, %v405
    %vm434 = vcmp.eq.s32.totalorder %v427, %v407
    %vm435 = vcmp.eq.s32.totalorder %v427, %v409
    %vm436 = vcmp.eq.s32.totalorder %v427, %v411
    %vm437 = vcmp.eq.s32.totalorder %v427, %v413
    %vm438 = vcmp.eq.s32.totalorder %v427, %v415
    %vm439 = vcmp.eq.s32.totalorder %v427, %v417
    %vm440 = vcmp.eq.s32.totalorder %v427, %v419
    %vm441 = vcmp.eq.s32.totalorder %v427, %v421
    %vm442 = vcmp.eq.s32.totalorder %v427, %v423
    %vm443 = vcmp.eq.s32.totalorder %v427, %v425
    %v444 = vsel %vm428, 1, 0
    %v445 = vsel %vm429, 1, 0
    %v446 = vsel %vm430, 1, 0
    %v447 = vsel %vm431, 1, 0
    %v448 = vsel %vm432, 1, 0
    %v449 = vsel %vm433, 1, 0
    %v450 = vsel %vm434, 1, 0
    %v451 = vsel %vm435, 1, 0
    %v452 = vsel %vm436, 1, 0
    %v453 = vsel %vm437, 1, 0
    %v454 = vsel %vm438, 1, 0
    %v455 = vsel %vm439, 1, 0
    %v456 = vsel %vm440, 1, 0
    %v457 = vsel %vm441, 1, 0
    %v458 = vsel %vm442, 1, 0
    %v459 = vsel %vm443, 1, 0
    %v460 = vcvt.s32.f32 %v444
    %v461 = vcvt.s32.f32 %v445
    %v462 = vcvt.s32.f32 %v446
    %v463 = vcvt.s32.f32 %v447
    %v464 = vcvt.s32.f32 %v448
    %v465 = vcvt.s32.f32 %v449
    %v466 = vcvt.s32.f32 %v450
    %v467 = vcvt.s32.f32 %v451
    %v468 = vcvt.s32.f32 %v452
    %v469 = vcvt.s32.f32 %v453
    %v470 = vcvt.s32.f32 %v454
    %v471 = vcvt.s32.f32 %v455
    %v472 = vcvt.s32.f32 %v456
    %v473 = vcvt.s32.f32 %v457
    %v474 = vcvt.s32.f32 %v458
    %v475 = vcvt.s32.f32 %v459
    %v476 = vld [vmem:[%s2] sm:$0xff]
    %v477 = vld [vmem:[%s2 + $0x8] sm:$0xff]
    %v478 = vld [vmem:[%s2 + $0x10] sm:$0xff]
    %v479 = vld [vmem:[%s2 + $0x18] sm:$0xff]
    %v480 = vld [vmem:[%s2 + $0x20] sm:$0xff]
    %v481 = vld [vmem:[%s2 + $0x28] sm:$0xff]
    %v482 = vld [vmem:[%s2 + $0x30] sm:$0xff]
    %v483 = vld [vmem:[%s2 + $0x38] sm:$0xff]
    %v485 = vsel %vm345, %v460, 0
    %v488 = vsel %vm345, %v461, 0
    %v491 = vsel %vm345, %v462, 0
    %v494 = vsel %vm345, %v463, 0
    %v497 = vsel %vm345, %v464, 0
    %v500 = vsel %vm345, %v465, 0
    %v503 = vsel %vm345, %v466, 0
    %v506 = vsel %vm345, %v467, 0
    %v509 = vsel %vm345, %v468, 0
    %v512 = vsel %vm345, %v469, 0
    %v515 = vsel %vm345, %v470, 0
    %v518 = vsel %vm345, %v471, 0
    %v521 = vsel %vm345, %v472, 0
    %v524 = vsel %vm345, %v473, 0
    %v527 = vsel %vm345, %v474, 0
    %v530 = vsel %vm345, %v475, 0
    %532 = vmatprep.subr.mxu0 0.0
    %533 = vmatpush1.msra.mxu0 0.0
    %534 = vmatprep.subr.mxu0 0.0
    %535 = vmatpush1.msra.mxu0 0.0
    %536 = vmatprep.subr.mxu0 0.0
    %537 = vmatpush1.msra.mxu0 0.0
    %538 = vmatprep.subr.mxu0 0.0
    %539 = vmatpush1.msra.mxu0 0.0
    %540 = vmatprep.subr.mxu0 0.0
    %541 = vmatpush1.msra.mxu0 0.0
    %542 = vmatprep.subr.mxu0 0.0
    %543 = vmatpush1.msra.mxu0 0.0
    %544 = vmatprep.subr.mxu0 0.0
    %545 = vmatpush1.msra.mxu0 0.0
    %546 = vmatprep.subr.mxu0 0.0
    %547 = vmatpush1.msra.mxu0 0.0
    %548 = vmatprep.subr.mxu0 0.0
    %549 = vmatpush1.msra.mxu0 %v483
    %550 = vmatprep.subr.mxu0 0.0
    %551 = vmatpush1.msra.mxu0 %v482
    %552 = vmatprep.subr.mxu0 0.0
    %553 = vmatpush1.msra.mxu0 %v481
    %554 = vmatprep.subr.mxu0 0.0
    %555 = vmatpush1.msra.mxu0 %v480
    %556 = vmatprep.subr.mxu0 0.0
    %557 = vmatpush1.msra.mxu0 %v479
    %558 = vmatprep.subr.mxu0 0.0
    %559 = vmatpush1.msra.mxu0 %v478
    %560 = vmatprep.subr.mxu0 0.0
    %561 = vmatpush1.msra.mxu0 %v477
    %562 = vmatprep.subr.mxu0 0.0
    %563 = vmatpush1.msra.mxu0 %v476
    %564 = vmatprep.subr.mxu0 0.0
    %565 = vmatpush2.msra.mxu0 0.0
    %566 = vmatprep.subr.mxu0 0.0
    %567 = vmatpush2.msra.mxu0 0.0
    %568 = vmatprep.subr.mxu0 0.0
    %569 = vmatpush2.msra.mxu0 0.0
    %570 = vmatprep.subr.mxu0 0.0
    %571 = vmatpush2.msra.mxu0 0.0
    %572 = vmatprep.subr.mxu0 0.0
    %573 = vmatpush2.msra.mxu0 0.0
    %574 = vmatprep.subr.mxu0 0.0
    %575 = vmatpush2.msra.mxu0 0.0
    %576 = vmatprep.subr.mxu0 0.0
    %577 = vmatpush2.msra.mxu0 0.0
    %578 = vmatprep.subr.mxu0 0.0
    %579 = vmatpush2.msra.mxu0 0.0
    %580 = vmatprep.subr.mxu0 0.0
    %581 = vmatpush2.msra.mxu0 0.0
    %582 = vmatprep.subr.mxu0 0.0
    %583 = vmatpush2.msra.mxu0 0.0
    %584 = vmatprep.subr.mxu0 0.0
    %585 = vmatpush2.msra.mxu0 0.0
    %586 = vmatprep.subr.mxu0 0.0
    %587 = vmatpush2.msra.mxu0 0.0
    %588 = vmatprep.subr.mxu0 0.0
    %589 = vmatpush2.msra.mxu0 0.0
    %590 = vmatprep.subr.mxu0 0.0
    %591 = vmatpush2.msra.mxu0 0.0
    %592 = vmatprep.subr.mxu0 0.0
    %593 = vmatpush2.msra.mxu0 0.0
    %594 = vmatprep.subr.mxu0 0.0
    %595 = vmatpush2.msra.mxu0 0.0
    %596 = vmatprep.mubr.f32.mxu0 0.0
    %597 = vmatmul.mubr.f32.gmra.mxu0 %v485
    %v598 = vpop.f32.mrf.mxu0
    %v599 = vadd.f32 0.0, %v598
    %v600 = vpop.f32.mrf.mxu0
    %601 = vmatprep.mubr.f32.mxu0 0.0
    %602 = vmatmul.mubr.f32.gmra.mxu0 %v488
    %v603 = vpop.f32.mrf.mxu0
    %v604 = vadd.f32 0.0, %v603
    %v605 = vpop.f32.mrf.mxu0
    %606 = vmatprep.mubr.f32.mxu0 0.0
    %607 = vmatmul.mubr.f32.gmra.mxu0 %v491
    %v608 = vpop.f32.mrf.mxu0
    %v609 = vadd.f32 0.0, %v608
    %v610 = vpop.f32.mrf.mxu0
    %611 = vmatprep.mubr.f32.mxu0 0.0
    %612 = vmatmul.mubr.f32.gmra.mxu0 %v494
    %v613 = vpop.f32.mrf.mxu0
    %v614 = vadd.f32 0.0, %v613
    %v615 = vpop.f32.mrf.mxu0
    %616 = vmatprep.mubr.f32.mxu0 0.0
    %617 = vmatmul.mubr.f32.gmra.mxu0 %v497
    %v618 = vpop.f32.mrf.mxu0
    %v619 = vadd.f32 0.0, %v618
    %v620 = vpop.f32.mrf.mxu0
    %621 = vmatprep.mubr.f32.mxu0 0.0
    %622 = vmatmul.mubr.f32.gmra.mxu0 %v500
    %v623 = vpop.f32.mrf.mxu0
    %v624 = vadd.f32 0.0, %v623
    %v625 = vpop.f32.mrf.mxu0
    %626 = vmatprep.mubr.f32.mxu0 0.0
    %627 = vmatmul.mubr.f32.gmra.mxu0 %v503
    %v628 = vpop.f32.mrf.mxu0
    %v629 = vadd.f32 0.0, %v628
    %v630 = vpop.f32.mrf.mxu0
    %631 = vmatprep.mubr.f32.mxu0 0.0
    %632 = vmatmul.mubr.f32.gmra.mxu0 %v506
    %v633 = vpop.f32.mrf.mxu0
    %v634 = vadd.f32 0.0, %v633
    %v635 = vpop.f32.mrf.mxu0
    %636 = vmatprep.mubr.f32.mxu0 0.0
    %637 = vmatmul.mubr.f32.gmra.mxu0 %v509
    %v638 = vpop.f32.mrf.mxu0
    %v639 = vadd.f32 0.0, %v638
    %v640 = vpop.f32.mrf.mxu0
    %641 = vmatprep.mubr.f32.mxu0 0.0
    %642 = vmatmul.mubr.f32.gmra.mxu0 %v512
    %v643 = vpop.f32.mrf.mxu0
    %v644 = vadd.f32 0.0, %v643
    %v645 = vpop.f32.mrf.mxu0
    %646 = vmatprep.mubr.f32.mxu0 0.0
    %647 = vmatmul.mubr.f32.gmra.mxu0 %v515
    %v648 = vpop.f32.mrf.mxu0
    %v649 = vadd.f32 0.0, %v648
    %v650 = vpop.f32.mrf.mxu0
    %651 = vmatprep.mubr.f32.mxu0 0.0
    %652 = vmatmul.mubr.f32.gmra.mxu0 %v518
    %v653 = vpop.f32.mrf.mxu0
    %v654 = vadd.f32 0.0, %v653
    %v655 = vpop.f32.mrf.mxu0
    %656 = vmatprep.mubr.f32.mxu0 0.0
    %657 = vmatmul.mubr.f32.gmra.mxu0 %v521
    %v658 = vpop.f32.mrf.mxu0
    %v659 = vadd.f32 0.0, %v658
    %v660 = vpop.f32.mrf.mxu0
    %661 = vmatprep.mubr.f32.mxu0 0.0
    %662 = vmatmul.mubr.f32.gmra.mxu0 %v524
    %v663 = vpop.f32.mrf.mxu0
    %v664 = vadd.f32 0.0, %v663
    %v665 = vpop.f32.mrf.mxu0
    %666 = vmatprep.mubr.f32.mxu0 0.0
    %667 = vmatmul.mubr.f32.gmra.mxu0 %v527
    %v668 = vpop.f32.mrf.mxu0
    %v669 = vadd.f32 0.0, %v668
    %v670 = vpop.f32.mrf.mxu0
    %671 = vmatprep.mubr.f32.mxu0 0.0
    %672 = vmatmul.mubr.f32.gmra.mxu0 %v530
    %v673 = vpop.f32.mrf.mxu0
    %v674 = vadd.f32 0.0, %v673
    %v675 = vpop.f32.mrf.mxu0
    %676 = vdwg.mxu0
    %677 = vst.msk [vmem:[%s3] sm:$0xff] %vm51, %v599
    %678 = vst.msk [vmem:[%s3 + $0x8] sm:$0xff] %vm51, %v604
    %679 = vst.msk [vmem:[%s3 + $0x10] sm:$0xff] %vm51, %v609
    %680 = vst.msk [vmem:[%s3 + $0x18] sm:$0xff] %vm51, %v614
    %681 = vst.msk [vmem:[%s3 + $0x20] sm:$0xff] %vm51, %v619
    %682 = vst.msk [vmem:[%s3 + $0x28] sm:$0xff] %vm51, %v624
    %683 = vst.msk [vmem:[%s3 + $0x30] sm:$0xff] %vm51, %v629
    %684 = vst.msk [vmem:[%s3 + $0x38] sm:$0xff] %vm51, %v634
    %685 = vst.msk [vmem:[%s3 + $0x40] sm:$0xff] %vm51, %v639
    %686 = vst.msk [vmem:[%s3 + $0x48] sm:$0xff] %vm51, %v644
    %687 = vst.msk [vmem:[%s3 + $0x50] sm:$0xff] %vm51, %v649
    %688 = vst.msk [vmem:[%s3 + $0x58] sm:$0xff] %vm51, %v654
    %689 = vst.msk [vmem:[%s3 + $0x60] sm:$0xff] %vm51, %v659
    %690 = vst.msk [vmem:[%s3 + $0x68] sm:$0xff] %vm51, %v664
    %691 = vst.msk [vmem:[%s3 + $0x70] sm:$0xff] %vm51, %v669
    %692 = vst.msk [vmem:[%s3 + $0x78] sm:$0xff] %vm51, %v674
    %v693 = vsub.f32 %v267, %v348
    %v694 = vsub.f32 %v272, %v351
    %v695 = vsub.f32 %v277, %v354
    %v696 = vsub.f32 %v282, %v357
    %v697 = vsub.f32 %v287, %v360
    %v698 = vsub.f32 %v292, %v363
    %v699 = vsub.f32 %v297, %v366
    %v700 = vsub.f32 %v302, %v369
    %v701 = vsub.f32 %v307, %v372
    %v702 = vsub.f32 %v312, %v375
    %v703 = vsub.f32 %v317, %v378
    %v704 = vsub.f32 %v322, %v381
    %v705 = vsub.f32 %v327, %v384
    %v706 = vsub.f32 %v332, %v387
    %v707 = vsub.f32 %v337, %v390
    %v708 = vsub.f32 %v342, %v393
    %v709 = vmul.f32 %v693, 1.442695
    %v710 = vpow.pop %v709
    %v711 = vmul.f32 %v694, 1.442695
    %v712 = vpow.pop %v711
    %v713 = vmul.f32 %v695, 1.442695
    %v714 = vpow.pop %v713
    %v715 = vmul.f32 %v696, 1.442695
    %v716 = vpow.pop %v715
    %v717 = vmul.f32 %v697, 1.442695
    %v718 = vpow.pop %v717
    %v719 = vmul.f32 %v698, 1.442695
    %v720 = vpow.pop %v719
    %v721 = vmul.f32 %v699, 1.442695
    %v722 = vpow.pop %v721
    %v723 = vmul.f32 %v700, 1.442695
    %v724 = vpow.pop %v723
    %v725 = vmul.f32 %v701, 1.442695
    %v726 = vpow.pop %v725
    %v727 = vmul.f32 %v702, 1.442695
    %v728 = vpow.pop %v727
    %v729 = vmul.f32 %v703, 1.442695
    %v730 = vpow.pop %v729
    %v731 = vmul.f32 %v704, 1.442695
    %v732 = vpow.pop %v731
    %v733 = vmul.f32 %v705, 1.442695
    %v734 = vpow.pop %v733
    %v735 = vmul.f32 %v706, 1.442695
    %v736 = vpow.pop %v735
    %v737 = vmul.f32 %v707, 1.442695
    %v738 = vpow.pop %v737
    %v739 = vmul.f32 %v708, 1.442695
    %v740 = vpow.pop %v739
    %v741 = vsel %vm345, %v710, 0.0
    %742 = vadd.xlane.f32.xlu0 %v741
    %v743 = vpop.xlane.xlu0 %742
    %v744 = vsel %vm345, %v712, 0.0
    %745 = vadd.xlane.f32.xlu0 %v744
    %v746 = vpop.xlane.xlu0 %745
    %v747 = vsel %vm345, %v714, 0.0
    %748 = vadd.xlane.f32.xlu0 %v747
    %v749 = vpop.xlane.xlu0 %748
    %v750 = vsel %vm345, %v716, 0.0
    %751 = vadd.xlane.f32.xlu0 %v750
    %v752 = vpop.xlane.xlu0 %751
    %v753 = vsel %vm345, %v718, 0.0
    %754 = vadd.xlane.f32.xlu0 %v753
    %v755 = vpop.xlane.xlu0 %754
    %v756 = vsel %vm345, %v720, 0.0
    %757 = vadd.xlane.f32.xlu0 %v756
    %v758 = vpop.xlane.xlu0 %757
    %v759 = vsel %vm345, %v722, 0.0
    %760 = vadd.xlane.f32.xlu0 %v759
    %v761 = vpop.xlane.xlu0 %760
    %v762 = vsel %vm345, %v724, 0.0
    %763 = vadd.xlane.f32.xlu0 %v762
    %v764 = vpop.xlane.xlu0 %763
    %v765 = vsel %vm345, %v726, 0.0
    %766 = vadd.xlane.f32.xlu0 %v765
    %v767 = vpop.xlane.xlu0 %766
    %v768 = vsel %vm345, %v728, 0.0
    %769 = vadd.xlane.f32.xlu0 %v768
    %v770 = vpop.xlane.xlu0 %769
    %v771 = vsel %vm345, %v730, 0.0
    %772 = vadd.xlane.f32.xlu0 %v771
    %v773 = vpop.xlane.xlu0 %772
    %v774 = vsel %vm345, %v732, 0.0
    %775 = vadd.xlane.f32.xlu0 %v774
    %v776 = vpop.xlane.xlu0 %775
    %v777 = vsel %vm345, %v734, 0.0
    %778 = vadd.xlane.f32.xlu0 %v777
    %v779 = vpop.xlane.xlu0 %778
    %v780 = vsel %vm345, %v736, 0.0
    %781 = vadd.xlane.f32.xlu0 %v780
    %v782 = vpop.xlane.xlu0 %781
    %v783 = vsel %vm345, %v738, 0.0
    %784 = vadd.xlane.f32.xlu0 %v783
    %v785 = vpop.xlane.xlu0 %784
    %v786 = vsel %vm345, %v740, 0.0
    %787 = vadd.xlane.f32.xlu0 %v786
    %v788 = vpop.xlane.xlu0 %787
    %v789 = vlog2.pop %v743
    %v790 = vmul.f32 %v789, 0.6931472
    %v791 = vlog2.pop %v746
    %v792 = vmul.f32 %v791, 0.6931472
    %v793 = vlog2.pop %v749
    %v794 = vmul.f32 %v793, 0.6931472
    %v795 = vlog2.pop %v752
    %v796 = vmul.f32 %v795, 0.6931472
    %v797 = vlog2.pop %v755
    %v798 = vmul.f32 %v797, 0.6931472
    %v799 = vlog2.pop %v758
    %v800 = vmul.f32 %v799, 0.6931472
    %v801 = vlog2.pop %v761
    %v802 = vmul.f32 %v801, 0.6931472
    %v803 = vlog2.pop %v764
    %v804 = vmul.f32 %v803, 0.6931472
    %v805 = vlog2.pop %v767
    %v806 = vmul.f32 %v805, 0.6931472
    %v807 = vlog2.pop %v770
    %v808 = vmul.f32 %v807, 0.6931472
    %v809 = vlog2.pop %v773
    %v810 = vmul.f32 %v809, 0.6931472
    %v811 = vlog2.pop %v776
    %v812 = vmul.f32 %v811, 0.6931472
    %v813 = vlog2.pop %v779
    %v814 = vmul.f32 %v813, 0.6931472
    %v815 = vlog2.pop %v782
    %v816 = vmul.f32 %v815, 0.6931472
    %v817 = vlog2.pop %v785
    %v818 = vmul.f32 %v817, 0.6931472
    %v819 = vlog2.pop %v788
    %v820 = vmul.f32 %v819, 0.6931472
    %s821 = smul.u32 0, 128
    %v822 = vlaneseq
    %v823 = vshrl.u32 %v822, 7
    %v824 = vadd.s32 %v823, 8
    %v825 = vadd.s32 %v823, 16
    %v826 = vadd.s32 %v823, 24
    %v827 = vadd.s32 %v823, 32
    %v828 = vadd.s32 %v823, 40
    %v829 = vadd.s32 %v823, 48
    %v830 = vadd.s32 %v823, 56
    %v831 = vadd.s32 %v823, 64
    %v832 = vadd.s32 %v823, 72
    %v833 = vadd.s32 %v823, 80
    %v834 = vadd.s32 %v823, 88
    %v835 = vadd.s32 %v823, 96
    %v836 = vadd.s32 %v823, 104
    %v837 = vadd.s32 %v823, 112
    %v838 = vadd.s32 %v823, 120
    %v839 = vstv %s821
    %v840 = vadd.s32 %v839, %v823
    %v841 = vadd.s32 %v839, %v824
    %v842 = vadd.s32 %v839, %v825
    %v843 = vadd.s32 %v839, %v826
    %v844 = vadd.s32 %v839, %v827
    %v845 = vadd.s32 %v839, %v828
    %v846 = vadd.s32 %v839, %v829
    %v847 = vadd.s32 %v839, %v830
    %v848 = vadd.s32 %v839, %v831
    %v849 = vadd.s32 %v839, %v832
    %v850 = vadd.s32 %v839, %v833
    %v851 = vadd.s32 %v839, %v834
    %v852 = vadd.s32 %v839, %v835
    %v853 = vadd.s32 %v839, %v836
    %v854 = vadd.s32 %v839, %v837
    %v855 = vadd.s32 %v839, %v838
    %vm856 = vcmp.lt.s32.totalorder %v840, 16
    %vm857 = vcmp.lt.s32.totalorder %v841, 16
    %vm858 = vcmp.lt.s32.totalorder %v842, 16
    %vm859 = vcmp.lt.s32.totalorder %v843, 16
    %vm860 = vcmp.lt.s32.totalorder %v844, 16
    %vm861 = vcmp.lt.s32.totalorder %v845, 16
    %vm862 = vcmp.lt.s32.totalorder %v846, 16
    %vm863 = vcmp.lt.s32.totalorder %v847, 16
    %vm864 = vcmp.lt.s32.totalorder %v848, 16
    %vm865 = vcmp.lt.s32.totalorder %v849, 16
    %vm866 = vcmp.lt.s32.totalorder %v850, 16
    %vm867 = vcmp.lt.s32.totalorder %v851, 16
    %vm868 = vcmp.lt.s32.totalorder %v852, 16
    %vm869 = vcmp.lt.s32.totalorder %v853, 16
    %vm870 = vcmp.lt.s32.totalorder %v854, 16
    %vm871 = vcmp.lt.s32.totalorder %v855, 16
    %v872 = vsel %vm856, %v790, 0.0
    %v873 = vsel %vm857, %v792, 0.0
    %v874 = vsel %vm858, %v794, 0.0
    %v875 = vsel %vm859, %v796, 0.0
    %v876 = vsel %vm860, %v798, 0.0
    %v877 = vsel %vm861, %v800, 0.0
    %v878 = vsel %vm862, %v802, 0.0
    %v879 = vsel %vm863, %v804, 0.0
    %v880 = vsel %vm864, %v806, 0.0
    %v881 = vsel %vm865, %v808, 0.0
    %v882 = vsel %vm866, %v810, 0.0
    %v883 = vsel %vm867, %v812, 0.0
    %v884 = vsel %vm868, %v814, 0.0
    %v885 = vsel %vm869, %v816, 0.0
    %v886 = vsel %vm870, %v818, 0.0
    %v887 = vsel %vm871, %v820, 0.0
    %v888 = vadd.f32 %v872, %v873
    %v889 = vadd.f32 %v888, %v874
    %v890 = vadd.f32 %v889, %v875
    %v891 = vadd.f32 %v890, %v876
    %v892 = vadd.f32 %v891, %v877
    %v893 = vadd.f32 %v892, %v878
    %v894 = vadd.f32 %v893, %v879
    %v895 = vadd.f32 %v894, %v880
    %v896 = vadd.f32 %v895, %v881
    %v897 = vadd.f32 %v896, %v882
    %v898 = vadd.f32 %v897, %v883
    %v899 = vadd.f32 %v898, %v884
    %v900 = vadd.f32 %v899, %v885
    %v901 = vadd.f32 %v900, %v886
    %v902 = vadd.f32 %v901, %v887
    %v903 = vrot.slane %v902, 4
    %v904 = vadd.f32 %v902, %v903
    %v905 = vrot.slane %v904, 2
    %v906 = vadd.f32 %v904, %v905
    %v907 = vrot.slane %v906, 1
    %v908 = vadd.f32 %v906, %v907
    %vm909 = vcmask 0
    %910 = vst.msk [vmem:[#allocation4] sm:$0x1] %vm909, %v908
    %v911 = vlaneseq
    %v912 = vshrl.u32 %v911, 7
    %v913 = vsub.s32 %v427, %v912
    %v914 = vrot.slane %v395, %v913
    %v915 = vadd.s32 %v427, 4294967288
    %v916 = vlaneseq
    %v917 = vshrl.u32 %v916, 7
    %v918 = vsub.s32 %v915, %v917
    %v919 = vrot.slane %v397, %v918
    %vm920 = vcmask 130112
    %v921 = vsel %vm920, %v919, %v914
    %v922 = vadd.s32 %v427, 4294967280
    %v923 = vlaneseq
    %v924 = vshrl.u32 %v923, 7
    %v925 = vsub.s32 %v922, %v924
    %v926 = vrot.slane %v399, %v925
    %vm927 = vcmask 195712
    %v928 = vsel %vm927, %v926, %v921
    %v929 = vadd.s32 %v427, 4294967272
    %v930 = vlaneseq
    %v931 = vshrl.u32 %v930, 7
    %v932 = vsub.s32 %v929, %v931
    %v933 = vrot.slane %v401, %v932
    %vm934 = vcmask 261312
    %v935 = vsel %vm934, %v933, %v928
    %v936 = vadd.s32 %v427, 4294967264
    %v937 = vlaneseq
    %v938 = vshrl.u32 %v937, 7
    %v939 = vsub.s32 %v936, %v938
    %v940 = vrot.slane %v403, %v939
    %vm941 = vcmask 326912
    %v942 = vsel %vm941, %v940, %v935
    %v943 = vadd.s32 %v427, 4294967256
    %v944 = vlaneseq
    %v945 = vshrl.u32 %v944, 7
    %v946 = vsub.s32 %v943, %v945
    %v947 = vrot.slane %v405, %v946
    %vm948 = vcmask 392512
    %v949 = vsel %vm948, %v947, %v942
    %v950 = vadd.s32 %v427, 4294967248
    %v951 = vlaneseq
    %v952 = vshrl.u32 %v951, 7
    %v953 = vsub.s32 %v950, %v952
    %v954 = vrot.slane %v407, %v953
    %vm955 = vcmask 458112
    %v956 = vsel %vm955, %v954, %v949
    %v957 = vadd.s32 %v427, 4294967240
    %v958 = vlaneseq
    %v959 = vshrl.u32 %v958, 7
    %v960 = vsub.s32 %v957, %v959
    %v961 = vrot.slane %v409, %v960
    %vm962 = vcmask 523712
    %v963 = vsel %vm962, %v961, %v956
    %v964 = vadd.s32 %v427, 4294967232
    %v965 = vlaneseq
    %v966 = vshrl.u32 %v965, 7
    %v967 = vsub.s32 %v964, %v966
    %v968 = vrot.slane %v411, %v967
    %vm969 = vcmask 589312
    %v970 = vsel %vm969, %v968, %v963
    %v971 = vadd.s32 %v427, 4294967224
    %v972 = vlaneseq
    %v973 = vshrl.u32 %v972, 7
    %v974 = vsub.s32 %v971, %v973
    %v975 = vrot.slane %v413, %v974
    %vm976 = vcmask 654912
    %v977 = vsel %vm976, %v975, %v970
    %v978 = vadd.s32 %v427, 4294967216
    %v979 = vlaneseq
    %v980 = vshrl.u32 %v979, 7
    %v981 = vsub.s32 %v978, %v980
    %v982 = vrot.slane %v415, %v981
    %vm983 = vcmask 720512
    %v984 = vsel %vm983, %v982, %v977
    %v985 = vadd.s32 %v427, 4294967208
    %v986 = vlaneseq
    %v987 = vshrl.u32 %v986, 7
    %v988 = vsub.s32 %v985, %v987
    %v989 = vrot.slane %v417, %v988
    %vm990 = vcmask 786112
    %v991 = vsel %vm990, %v989, %v984
    %v992 = vadd.s32 %v427, 4294967200
    %v993 = vlaneseq
    %v994 = vshrl.u32 %v993, 7
    %v995 = vsub.s32 %v992, %v994
    %v996 = vrot.slane %v419, %v995
    %vm997 = vcmask 851712
    %v998 = vsel %vm997, %v996, %v991
    %v999 = vadd.s32 %v427, 4294967192
    %v1000 = vlaneseq
    %v1001 = vshrl.u32 %v1000, 7
    %v1002 = vsub.s32 %v999, %v1001
    %v1003 = vrot.slane %v421, %v1002
    %vm1004 = vcmask 917312
    %v1005 = vsel %vm1004, %v1003, %v998
    %v1006 = vadd.s32 %v427, 4294967184
    %v1007 = vlaneseq
    %v1008 = vshrl.u32 %v1007, 7
    %v1009 = vsub.s32 %v1006, %v1008
    %v1010 = vrot.slane %v423, %v1009
    %vm1011 = vcmask 982912
    %v1012 = vsel %vm1011, %v1010, %v1005
    %v1013 = vadd.s32 %v427, 4294967176
    %v1014 = vlaneseq
    %v1015 = vshrl.u32 %v1014, 7
    %v1016 = vsub.s32 %v1013, %v1015
    %v1017 = vrot.slane %v425, %v1016
    %vm1018 = vcmask 1048512
    %v1019 = vsel %vm1018, %v1017, %v1012
    %1020 = vst [vmem:[#allocation2] sm:$0x1] %v1019
    // Predicated region
    $region14: #{tpu_custom_call.1} parent=1 // pred_check
      _
    $region15: #{tpu_custom_call.1} parent=1 // pred_check_branch
      %1022 = sbr.rel (0) target = $region17
    $region16: #{tpu_custom_call.1} parent=1 // pred_region
      _
    $region17: #{tpu_custom_call.1} parent=1 // pred_fallthru
      _
    // Predicated region
    $region18: #{tpu_custom_call.1} parent=1 // pred_check
      _
    $region19: #{tpu_custom_call.1} parent=1 // pred_check_branch
      %1024 = sbr.rel (0) target = $region21
    $region20: #{tpu_custom_call.1} parent=1 // pred_region
      %s1026 = ssub.s32 16, 16
      %1027 = vsyncadd [#allocation3], %s1026
      %s1029 = sshll.u32 [#allocation2], 4
      %s1030 = int_to_ptr.vmem [resolvable:$true] %s1029
      %1032 = dma.vmem_to_hbm [thread:$0]  %s1030, 16, %s4, [#allocation3]
    $region21: #{tpu_custom_call.1} parent=1 // pred_fallthru
      _
    // Predicated region
    $region22: #{tpu_custom_call.1} parent=1 // pred_check
      _
    $region23: #{tpu_custom_call.1} parent=1 // pred_check_branch
      %1034 = sbr.rel (0) target = $region25
    $region24: #{tpu_custom_call.1} parent=1 // pred_region
      %s1036 = ssub.s32 16, 16
      %1037 = vsyncadd [#allocation5], %s1036
      %s1039 = sshll.u32 [#allocation4], 4
      %s1040 = int_to_ptr.vmem [resolvable:$true] %s1039
      %1042 = dma.vmem_to_hbm [thread:$0]  %s1040, 16, %s5, [#allocation5]
    $region25: #{tpu_custom_call.1} parent=1 // pred_fallthru
      _
    // Predicated region
    $region26: #{tpu_custom_call.1} parent=1 // pred_check
      _
    $region27: #{tpu_custom_call.1} parent=1 // pred_check_branch
      %1044 = sbr.rel (0) target = $region29
    $region28: #{tpu_custom_call.1} parent=1 // pred_region
      _
    $region29: #{tpu_custom_call.1} parent=1 // pred_fallthru
      _
    // Predicated region
    $region30: #{tpu_custom_call.1} parent=1 // pred_check
      _
    $region31: #{tpu_custom_call.1} parent=1 // pred_check_branch
      %1046 = sbr.rel (0) target = $region33
    $region32: #{tpu_custom_call.1} parent=1 // pred_region
      %1047 = dma.done [#allocation3], 16
    $region33: #{tpu_custom_call.1} parent=1 // pred_fallthru
      _
    // Predicated region
    $region34: #{tpu_custom_call.1} parent=1 // pred_check
      _
    $region35: #{tpu_custom_call.1} parent=1 // pred_check_branch
      %1049 = sbr.rel (0) target = $region37
    $region36: #{tpu_custom_call.1} parent=1 // pred_region
      %1050 = dma.done [#allocation5], 16
    $region37: #{tpu_custom_call.1} parent=1 // pred_fallthru
      _
    %1051 = vsyncpa [#allocation3], 1
    %1052 = vsyncpa [#allocation5], 1

</llo_original>
